<compile_context>
chip_gen: v6e
topology: v6e:2x2x1
jax: 0.10.0
libtpu: 0.0.40
codegen_flags: <defaults>
</compile_context>

<pallas_src>
import jax
import jax.numpy as jnp
from jax.experimental import pallas as pl
from jax.experimental.pallas import tpu as pltpu

LANE = 128
MAX_TILE_R = 2048  # 2048 x 128 x 4B = 1 MiB per f32 input block (4 MiB double-buffered
                   # for both inputs) -> fits default scoped VMEM on v5e/v6e/v7x.


def _make_huber_kernel(delta: float, total_n: int, tile_r: int, bpc: int,
                       needs_mask: bool):
    d_abs = abs(float(delta))
    d2 = d_abs * d_abs
    inv_n = 1.0 / float(total_n)

    def kernel(yp_ref, y_ref, out_ref, acc_ref):
        c = pl.program_id(0)   # core-split axis ("parallel")
        j = pl.program_id(1)   # reduction axis ("arbitrary")

        @pl.when(j == 0)
        def _():
            acc_ref[...] = jnp.zeros_like(acc_ref)

        diff = y_ref[...].astype(jnp.float32) - yp_ref[...].astype(jnp.float32)
        # delta^2*(sqrt(1+(diff/delta)^2)-1) == |delta|*sqrt(delta^2+diff^2) - delta^2
        val = d_abs * jnp.sqrt(d2 + diff * diff) - d2

        if needs_mask:
            # Mask out rows/lanes past the logical end of the tensor (partial last
            # block and/or clamped overhang block of the last core).
            row = jax.lax.broadcasted_iota(jnp.int32, (tile_r, LANE), 0)
            lane = jax.lax.broadcasted_iota(jnp.int32, (tile_r, LANE), 1)
            blk = c * bpc + j                      # logical (unclamped) block index
            elem = (blk * tile_r + row) * LANE + lane
            val = jnp.where(elem < total_n, val, 0.0)

        # 128-way per-lane partial sums in VMEM (VPU adds + one small sublane reduce).
        acc_ref[...] += jnp.sum(val, axis=0, keepdims=True)

        @pl.when(j == pl.num_programs(1) - 1)
        def _():
            # Single cross-lane reduce + scalar store per core.
            out_ref[0, 0] = jnp.sum(acc_ref[...]) * inv_n

    return kernel


def huber_loss_pallas(y_prim: jax.Array, y: jax.Array, delta: float) -> jax.Array:
    assert y_prim.shape == y.shape
    total_n = y_prim.size

    # Flatten (free reshape for contiguous arrays); keep the native dtype.
    flat_p = y_prim.reshape(-1)
    flat_y = y.reshape(-1)

    pad = (-total_n) % LANE
    if pad:
        # TODO(synk): only taken when numel % 128 != 0; a ~N-element copy. The padded
        # zeros contribute exactly 0 and are additionally excluded by the in-kernel mask.
        flat_p = jnp.pad(flat_p, (0, pad))
        flat_y = jnp.pad(flat_y, (0, pad))
    rows = (total_n + pad) // LANE

    # Block size: full extent for small inputs, else 1 MiB-class row tiles.
    if rows <= MAX_TILE_R:
        tile_r = rows                 # full-dim block: always a legal block shape
    else:
        tile_r = MAX_TILE_R           # multiple of 8 (and 16 for bf16 packing)
    nblocks = pl.cdiv(rows, tile_r)

    # Split the reduction across 2 TensorCores when there is enough work
    # (v7x megacore; a size-1/2 "parallel" axis is harmless on v5e/v6e).
    ncores = 2 if nblocks >= 2 else 1
    bpc = pl.cdiv(nblocks, ncores)    # inner (reduction) blocks per core

    needs_mask = (ncores * bpc * tile_r != rows) or (rows * LANE != total_n)

    if ncores * bpc == nblocks:
        def in_idx(c, j):
            return (c * bpc + j, 0)
    else:
        # Last core has one overhanging step: clamp its block index to stay in
        # bounds; its contribution is zeroed by the in-kernel mask.
        def in_idx(c, j):
            return (jnp.minimum(c * bpc + j, nblocks - 1), 0)

    xp = flat_p.reshape(rows, LANE)
    xy = flat_y.reshape(rows, LANE)

    kernel = _make_huber_kernel(delta, total_n, tile_r, bpc, needs_mask)

    partials = pl.pallas_call(
        kernel,
        out_shape=jax.ShapeDtypeStruct((ncores, 1), jnp.float32),
        grid_spec=pltpu.PrefetchScalarGridSpec(
            num_scalar_prefetch=0,
            grid=(ncores, bpc),
            in_specs=[
                pl.BlockSpec((tile_r, LANE), in_idx),
                pl.BlockSpec((tile_r, LANE), in_idx),
            ],
            out_specs=pl.BlockSpec((1, 1), lambda c, j: (c, 0),
                                   memory_space=pltpu.SMEM),
            scratch_shapes=[pltpu.VMEM((1, LANE), jnp.float32)],
        ),
        compiler_params=pltpu.CompilerParams(
            dimension_semantics=("parallel", "arbitrary")),
    )(xp, xy)

    # Per-core partials are already scaled by 1/N; sum them (tiny XLA reduce).
    return jnp.sum(partials)


def huber_loss_ref(y_prim, y, delta):
    d = (y - y_prim) / delta
    return jnp.mean(delta ** 2 * (jnp.sqrt(1.0 + d * d) - 1.0))


if __name__ == "__main__":
    key = jax.random.PRNGKey(0)
    k1, k2 = jax.random.split(key)
    # Small NCHW-like shapes consistent with the module's elementwise forward.
    shape = (2, 4, 16, 16)
    y_prim = jax.random.normal(k1, shape, dtype=jnp.float32)
    y = jax.random.normal(k2, shape, dtype=jnp.float32)
    delta = 1.0

    out = huber_loss_pallas(y_prim, y, delta)
    out = jax.block_until_ready(out)

    ref = huber_loss_ref(y_prim, y, delta)
    assert jnp.allclose(out, ref, rtol=1e-5, atol=1e-6), (out, ref)
    print("KERNEL_OK")
</pallas_src>

<mosaic_0001>
module attributes {stable_mosaic.version = 11 : i64} {
  func.func @kernel(%arg0: i32, %arg1: i32, %arg2: memref<16x128xf32, #tpu.memory_space<vmem>>, %arg3: memref<16x128xf32, #tpu.memory_space<vmem>>, %arg4: memref<1x1xf32, #tpu.memory_space<smem>>, %arg5: memref<1x128xf32, #tpu.memory_space<vmem>>) attributes {dimension_semantics = [#tpu.dimension_semantics<parallel>, #tpu.dimension_semantics<arbitrary>], iteration_bounds = array<i64: 1, 1>, scalar_prefetch = 0 : i64, scratch_operands = 1 : i64, tpu.core_type = #tpu.core_type<tc>, window_params = [{transform_indices = @transform_0, window_bounds = array<i64: 16, 128>}, {transform_indices = @transform_1, window_bounds = array<i64: 16, 128>}, {transform_indices = @transform_2, window_bounds = array<i64: 1, 1>}]} {
    %c0_i32 = arith.constant 0 : i32
    %0 = arith.cmpi eq, %arg1, %c0_i32 : i32
    %1 = arith.extui %0 : i1 to i32
    %c0_i32_0 = arith.constant 0 : i32
    %2 = arith.cmpi ne, %1, %c0_i32_0 : i32
    scf.if %2 {
      %cst_13 = arith.constant 0.000000e+00 : f32
      %22 = vector.broadcast %cst_13 : f32 to vector<1x128xf32>
      %c0_14 = arith.constant 0 : index
      %c0_15 = arith.constant 0 : index
      %23 = vector.load %arg5[%c0_14, %c0_15] : memref<1x128xf32, #tpu.memory_space<vmem>>, vector<1x128xf32>
      tpu.vector_store %arg5[%c0_14, %c0_15], %22 {strides = array<i32>} : memref<1x128xf32, #tpu.memory_space<vmem>>, vector<1x128xf32>,
    } else {
    }
    %c0 = arith.constant 0 : index
    %c0_1 = arith.constant 0 : index
    %3 = vector.load %arg3[%c0, %c0_1] : memref<16x128xf32, #tpu.memory_space<vmem>>, vector<16x128xf32>
    %c0_2 = arith.constant 0 : index
    %c0_3 = arith.constant 0 : index
    %4 = vector.load %arg2[%c0_2, %c0_3] : memref<16x128xf32, #tpu.memory_space<vmem>>, vector<16x128xf32>
    %5 = arith.subf %3, %4 : vector<16x128xf32>
    %6 = arith.mulf %5, %5 : vector<16x128xf32>
    %cst = arith.constant 1.000000e+00 : f32
    %7 = vector.broadcast %cst : f32 to vector<16x128xf32>
    %8 = arith.addf %7, %6 : vector<16x128xf32>
    %9 = math.sqrt %8 : vector<16x128xf32>
    %cst_4 = arith.constant 1.000000e+00 : f32
    %10 = vector.broadcast %cst_4 : f32 to vector<16x128xf32>
    %11 = arith.mulf %10, %9 : vector<16x128xf32>
    %cst_5 = arith.constant 1.000000e+00 : f32
    %12 = vector.broadcast %cst_5 : f32 to vector<16x128xf32>
    %13 = arith.subf %11, %12 : vector<16x128xf32>
    %c0_6 = arith.constant 0 : index
    %c0_7 = arith.constant 0 : index
    %14 = vector.load %arg5[%c0_6, %c0_7] : memref<1x128xf32, #tpu.memory_space<vmem>>, vector<1x128xf32>
    %cst_8 = arith.constant dense<0.000000e+00> : vector<128xf32>
    %15 = vector.multi_reduction <add>, %13, %cst_8 [0] : vector<16x128xf32> to vector<128xf32>
    %16 = vector.shape_cast %15 : vector<128xf32> to vector<1x128xf32>
    %17 = arith.addf %14, %16 : vector<1x128xf32>
    %c0_9 = arith.constant 0 : index
    %c0_10 = arith.constant 0 : index
    %18 = vector.load %arg5[%c0_9, %c0_10] : memref<1x128xf32, #tpu.memory_space<vmem>>, vector<1x128xf32>
    tpu.vector_store %arg5[%c0_9, %c0_10], %17 {strides = array<i32>} : memref<1x128xf32, #tpu.memory_space<vmem>>, vector<1x128xf32>,
    %c0_i32_11 = arith.constant 0 : i32
    %19 = arith.cmpi eq, %arg1, %c0_i32_11 : i32
    %20 = arith.extui %19 : i1 to i32
    %c0_i32_12 = arith.constant 0 : i32
    %21 = arith.cmpi ne, %20, %c0_i32_12 : i32
    scf.if %21 {
      %c0_13 = arith.constant 0 : index
      %c0_14 = arith.constant 0 : index
      %22 = vector.load %arg5[%c0_13, %c0_14] : memref<1x128xf32, #tpu.memory_space<vmem>>, vector<1x128xf32>
      %23 = vector.shape_cast %22 : vector<1x128xf32> to vector<1x1x128xf32>
      %cst_15 = arith.constant dense<0.000000e+00> : vector<1xf32>
      %24 = vector.multi_reduction <add>, %23, %cst_15 [1, 2] : vector<1x1x128xf32> to vector<1xf32>
      %25 = vector.shape_cast %24 : vector<1xf32> to vector<1x1x1xf32>
      %26 = vector.extract %25[0, 0, 0] : f32 from vector<1x1x1xf32>
      %cst_16 = arith.constant 4.8828125E-4 : f32
      %27 = arith.mulf %26, %cst_16 : f32
      %c0_17 = arith.constant 0 : index
      %c0_18 = arith.constant 0 : index
      %28 = memref.load %arg4[%c0_17, %c0_18] : memref<1x1xf32, #tpu.memory_space<smem>>
      memref.store %27, %arg4[%c0_17, %c0_18] : memref<1x1xf32, #tpu.memory_space<smem>>
    } else {
    }
    return
  }
  func.func @transform_0(%arg0: i32, %arg1: i32) -> (i32, i32) {
    %c1_i32 = arith.constant 1 : i32
    %0 = arith.muli %arg0, %c1_i32 : i32
    %1 = arith.addi %0, %arg1 : i32
    %c0_i32 = arith.constant 0 : i32
    %c0_i32_0 = arith.constant 0 : i32
    return %1, %c0_i32 : i32, i32
  }
  func.func @transform_1(%arg0: i32, %arg1: i32) -> (i32, i32) {
    %c1_i32 = arith.constant 1 : i32
    %0 = arith.muli %arg0, %c1_i32 : i32
    %1 = arith.addi %0, %arg1 : i32
    %c0_i32 = arith.constant 0 : i32
    %c0_i32_0 = arith.constant 0 : i32
    return %1, %c0_i32 : i32, i32
  }
  func.func @transform_2(%arg0: i32, %arg1: i32) -> (i32, i32) {
    %c0_i32 = arith.constant 0 : i32
    %c0_i32_0 = arith.constant 0 : i32
    return %arg0, %c0_i32 : i32, i32
  }
}

</mosaic_0001>

<llo_original>
// kernel: tpu_custom_call.1
$region0: #{tpu_custom_call.1}
  #allocation0 [shape = 'u32[]', space=smem, size = 0x4, offset = 0x4, fixed_abs, tag = 'smem constant byte address 0x4 - core index']
  #allocation1 [shape = 'u32[144,128]{1,0:T(1,128)}', space=vmem, size = 0x12000, scoped, tag = 'internal scratch']
  #allocation2 [shape = 'f32[1,128]{1,0:T(1,128)}', space=vmem, size = 0x200, scoped, tag = 'scratch operand']
  %s0 = inlined_call_operand.hbm [shape: f32[16,128], index: 0, kind: input, shape index: {}]
  %s1 = inlined_call_operand.hbm [shape: f32[16,128], index: 1, kind: input, shape index: {}]
  %s2 = inlined_call_operand.hbm [shape: f32[1,1], index: 2, kind: output, shape index: {}]
  %s3 = sld [smem:[#allocation0]]
  $region34: #{tpu_custom_call.1} parent=0
    _
  %s5 = ssub.s32 1, %s3
  %s6 = scalar_select 0, %s5, %s3
  $region1: #{tpu_custom_call.1} parent=0
    #allocation3 [shape = 'u8[8192]{0}', space=vmem, size = 0x2000, scoped, tag = 'input window, operand 0, single buffered']
    #allocation4 [shape = 's32[1]{0}', space=sflag, size = 0x4, scoped, tag = 'scoped memory for tpu_custom_call.1']
    #allocation5 [shape = 's32[1]{0}', space=sflag, size = 0x4, scoped, tag = 'scoped memory for tpu_custom_call.1']
    #allocation6 [shape = 'u8[8192]{0}', space=vmem, size = 0x2000, scoped, tag = 'input window, operand 1, single buffered']
    #allocation7 [shape = 's32[1]{0}', space=sflag, size = 0x4, scoped, tag = 'scoped memory for tpu_custom_call.1']
    #allocation8 [shape = 'u8[512]{0}', space=smem, size = 0x200, scoped, tag = 'output window, operand 0, single buffered']
    %7 = vsyncpa [#allocation4], 0
    %8 = vsyncpa [#allocation7], 0
    %9 = vsyncpa [#allocation5], 0
    // Predicated region
    $region2: #{tpu_custom_call.1} parent=1 // pred_check
      _
    $region3: #{tpu_custom_call.1} parent=1 // pred_check_branch
      %11 = sbr.rel (0) target = $region5
    $region4: #{tpu_custom_call.1} parent=1 // pred_region
      %s12 = sadd.s32 0, 0
      %s13 = smul.u32 2, %s12
      %s15 = ssub.s32 256, 256
      %16 = vsyncadd [#allocation4], %s15
      %s17 = smul.addr %s13, 128
      %s18 = scalar_lea.hbm %s0, %s17
      %s19 = sshll.u32 [#allocation3], 4
      %s20 = int_to_ptr.vmem [resolvable:$true] %s19
      %25 = dma.hbm_to_vmem [thread:$0]  %s18, 256, %s20, [#allocation4], 128, 128, 8
    $region5: #{tpu_custom_call.1} parent=1 // pred_fallthru
      _
    // Predicated region
    $region6: #{tpu_custom_call.1} parent=1 // pred_check
      _
    $region7: #{tpu_custom_call.1} parent=1 // pred_check_branch
      %27 = sbr.rel (0) target = $region9
    $region8: #{tpu_custom_call.1} parent=1 // pred_region
      %s28 = sadd.s32 0, 0
      %s29 = smul.u32 2, %s28
      %s31 = ssub.s32 256, 256
      %32 = vsyncadd [#allocation7], %s31
      %s33 = smul.addr %s29, 128
      %s34 = scalar_lea.hbm %s1, %s33
      %s35 = sshll.u32 [#allocation6], 4
      %s36 = int_to_ptr.vmem [resolvable:$true] %s35
      %41 = dma.hbm_to_vmem [thread:$0]  %s34, 256, %s36, [#allocation7], 128, 128, 8
    $region9: #{tpu_custom_call.1} parent=1 // pred_fallthru
      _
    // Predicated region
    $region10: #{tpu_custom_call.1} parent=1 // pred_check
      _
    $region11: #{tpu_custom_call.1} parent=1 // pred_check_branch
      %43 = sbr.rel (0) target = $region13
    $region12: #{tpu_custom_call.1} parent=1 // pred_region
      %44 = dma.done [#allocation4], 256
    $region13: #{tpu_custom_call.1} parent=1 // pred_fallthru
      _
    // Predicated region
    $region14: #{tpu_custom_call.1} parent=1 // pred_check
      _
    $region15: #{tpu_custom_call.1} parent=1 // pred_check_branch
      %46 = sbr.rel (0) target = $region17
    $region16: #{tpu_custom_call.1} parent=1 // pred_region
      %47 = dma.done [#allocation7], 256
    $region17: #{tpu_custom_call.1} parent=1 // pred_fallthru
      _
    %s48 = sadd.s32 0, 0
    %s49 = smul.u32 2, %s48
    %s50 = sadd.s32 0, 0
    %s51 = smul.u32 2, %s50
    %p52 = scmp.eq.s32.totalorder 0, 0
    // Predicated region
    $region18: #{tpu_custom_call.1} parent=1 // pred_check
      %p53 = pneg %p52
    $region19: #{tpu_custom_call.1} parent=1 // pred_check_branch
      %55 = sbr.rel (%p53) target = $region21
    $region20: #{tpu_custom_call.1} parent=1 // pred_region
      %56 = vst [vmem:[#allocation2] sm:$0x1] 0.0
    $region21: #{tpu_custom_call.1} parent=1 // pred_fallthru
      _
    %v57 = vld [vmem:[#allocation6] sm:$0xff]
    %v58 = vld [vmem:[#allocation6 + $0x8] sm:$0xff]
    %v59 = vld [vmem:[#allocation3] sm:$0xff]
    %v60 = vld [vmem:[#allocation3 + $0x8] sm:$0xff]
    %v61 = vsub.f32 %v57, %v59
    %v62 = vsub.f32 %v58, %v60
    %v63 = vmul.f32 %v61, %v61
    %v64 = vmul.f32 %v62, %v62
    %v65 = vadd.f32 %v63, 1.0
    %v66 = vadd.f32 %v64, 1.0
    %v67 = vrsqrt.pop %v65
    %v68 = vmul.f32 %v65, %v67
    %vm69 = vcmp.eq.f32.partialorder %v65, inf
    %v70 = vsel %vm69, %v65, %v68
    %vm71 = vcmp.eq.f32.partialorder %v65, 0.0
    %v72 = vand.u32 %v65, 2147483648
    %v73 = vsel %vm71, %v72, %v70
    %v74 = vrsqrt.pop %v66
    %v75 = vmul.f32 %v66, %v74
    %vm76 = vcmp.eq.f32.partialorder %v66, inf
    %v77 = vsel %vm76, %v66, %v75
    %vm78 = vcmp.eq.f32.partialorder %v66, 0.0
    %v79 = vand.u32 %v66, 2147483648
    %v80 = vsel %vm78, %v79, %v77
    %v81 = vsub.f32 %v73, 1.0
    %v82 = vsub.f32 %v80, 1.0
    %v83 = vld [vmem:[#allocation2] sm:$0x1]
    %v84 = vadd.f32 %v81, %v82
    %v85 = vrot.slane %v84, 4
    %v86 = vadd.f32 %v84, %v85
    %v87 = vrot.slane %v86, 2
    %v88 = vadd.f32 %v86, %v87
    %v89 = vrot.slane %v88, 1
    %v90 = vadd.f32 %v88, %v89
    %v91 = vadd.f32 %v83, %v90
    %92 = vst [vmem:[#allocation2] sm:$0x1] %v91
    // Predicated region
    $region22: #{tpu_custom_call.1} parent=1 // pred_check
      %p93 = pneg %p52
    $region23: #{tpu_custom_call.1} parent=1 // pred_check_branch
      %95 = sbr.rel (%p93) target = $region25
    $region24: #{tpu_custom_call.1} parent=1 // pred_region
      %v96 = vld [vmem:[#allocation2] sm:$0x1]
      %vm97 = vcmask 1040384
      %v98 = vsel %vm97, %v96, 0.0
      %99 = vadd.xlane.f32.xlu0 %v98
      %v100 = vpop.xlane.xlu0 %99
      %v101 = vrot.slane %v100, 4
      %v102 = vadd.f32 %v100, %v101
      %v103 = vrot.slane %v102, 2
      %v104 = vadd.f32 %v102, %v103
      %v105 = vrot.slane %v104, 1
      %v106 = vadd.f32 %v104, %v105
      %s107 = vtos %v106
      %s108 = smul.f32 %s107, 0.00048828125
      %s109 = scalar_lea.smem [#allocation8], 0
      %110 = sst [smem:[%s109]] %s108
    $region25: #{tpu_custom_call.1} parent=1 // pred_fallthru
      _
    // Predicated region
    $region26: #{tpu_custom_call.1} parent=1 // pred_check
      _
    $region27: #{tpu_custom_call.1} parent=1 // pred_check_branch
      %112 = sbr.rel (0) target = $region29
    $region28: #{tpu_custom_call.1} parent=1 // pred_region
      %s114 = ssub.s32 16, 16
      %115 = vsyncadd [#allocation5], %s114
      %118 = dma.smem_to_hbm [#allocation8], 16, %s2, [#allocation5]
    $region29: #{tpu_custom_call.1} parent=1 // pred_fallthru
      _
    // Predicated region
    $region30: #{tpu_custom_call.1} parent=1 // pred_check
      _
    $region31: #{tpu_custom_call.1} parent=1 // pred_check_branch
      %120 = sbr.rel (0) target = $region33
    $region32: #{tpu_custom_call.1} parent=1 // pred_region
      %121 = dma.done [#allocation5], 16
    $region33: #{tpu_custom_call.1} parent=1 // pred_fallthru
      _
    %122 = sfence
    %123 = vsyncpa [#allocation4], 1
    %124 = vsyncpa [#allocation7], 1
    %125 = vsyncpa [#allocation5], 1

</llo_original>
